<compile_context>
chip_gen: v7x
topology: tpu7x:2x2x1
jax: 0.10.0
libtpu: 0.0.40
codegen_flags: <defaults>
</compile_context>

<pallas_src>
import jax
import jax.numpy as jnp
from jax.experimental import pallas as pl
from jax.experimental.pallas import tpu as pltpu


# ----------------------------------------------------------------------------
# Kernel: one gene-tile of the batched RHS evaluation.
# ----------------------------------------------------------------------------
def velocity_encoder_kernel(
    emu_ref,      # VMEM (B, T)        emulator values (precomputed per call)
    u_ref,        # VMEM (B, TILE_G)   unspliced tile
    s_ref,        # VMEM (B, TILE_G)   spliced tile
    grn_t_ref,    # VMEM (T, TILE_G)   grn.T tile (transposed / padded once)
    params_ref,   # VMEM (4, TILE_G)   rows: [bias, beta, gamma, alpha_scale]
    du_ref,       # VMEM (B, TILE_G)   output du
    ds_ref,       # VMEM (B, TILE_G)   output ds
):
    # alpha_unconstr = emu_tf @ grn.T + bias                       -> (B, TILE_G)
    alpha_unconstr = jnp.dot(
        emu_ref[...], grn_t_ref[...], preferred_element_type=jnp.float32
    ) + params_ref[0:1, :]

    # alpha = softsign(clamp(alpha_unconstr, min=0.001))
    #         * clip(softplus(alpha_max), 0, 50)
    # (clamped value is >= 0.001 so |x| == x; abs dropped)
    alpha_c = jnp.maximum(alpha_unconstr, 0.001)
    alpha = (alpha_c / (1.0 + alpha_c)) * params_ref[3:4, :]

    u = u_ref[...]
    s = s_ref[...]
    bu = params_ref[1:2, :] * u                      # beta * u
    du_ref[...] = alpha - bu
    ds_ref[...] = bu - params_ref[2:3, :] * s        # beta*u - gamma*s


# ----------------------------------------------------------------------------
# One-time (per solve / per parameter update) precompute of everything that
# does not depend on (t, y). Call this OUTSIDE the ODE solver's step loop.
# ----------------------------------------------------------------------------
def _round_up(x, m):
    return ((x + m - 1) // m) * m


def prepare_params(raw):
    softplus = lambda x: jnp.logaddexp(x, 0.0)   # stable softplus

    grn = jnp.asarray(raw["grn"], jnp.float32)                     # (G, T)
    g, t_dim = grn.shape
    g_pad = _round_up(g, 128)
    lane_pad = g_pad - g

    grn_t = jnp.pad(grn.T, ((0, 0), (0, lane_pad)))                # (T, G_pad)

    bias = jnp.asarray(raw["alpha_unconstr_bias"], jnp.float32).reshape(1, g)
    beta = jnp.clip(softplus(jnp.asarray(raw["beta_mean_unconstr"],
                                         jnp.float32)), 0.0, 50.0).reshape(1, g)
    gamma = jnp.clip(softplus(jnp.asarray(raw["gamma_mean_unconstr"],
                                          jnp.float32)), 0.0, 50.0).reshape(1, g)
    alpha_scale = jnp.clip(softplus(jnp.asarray(raw["alpha_unconstr_max"],
                                                jnp.float32)), 0.0, 50.0).reshape(1, g)
    # One lane-dense (4, G_pad) slab: rows = [bias, beta, gamma, alpha_scale]
    params = jnp.concatenate([bias, beta, gamma, alpha_scale], axis=0)
    params = jnp.pad(params, ((0, 0), (0, lane_pad)))

    return {
        "grn_t": grn_t,                                            # (T, G_pad) f32
        "params": params,                                          # (4, G_pad) f32
        "h": jnp.exp(jnp.asarray(raw["log_h"], jnp.float32)).reshape(1, t_dim),
        "phi": jnp.exp(jnp.asarray(raw["log_phi"], jnp.float32)).reshape(1, t_dim),
        "tau": jnp.asarray(raw["tau"], jnp.float32).reshape(1, t_dim),
        "o": jnp.asarray(raw["o"], jnp.float32).reshape(1, t_dim),
    }


# ----------------------------------------------------------------------------
# Tile sizing: largest 128-multiple divisor of G_pad under the VMEM budget,
# capped at max_tile_g, keeping >= 2 gene tiles when possible (v7x: 2 TCs).
# ----------------------------------------------------------------------------
def _per_step_bytes(b, t_dim, tile_g):
    # double-buffered windows: emu + u + s + grn tile + params + du + ds (f32)
    return 2 * (b * t_dim + (4 * b + t_dim + 4) * tile_g) * 4


def _choose_tile_g(g_pad, b, t_dim, max_tile_g=1024, vmem_budget=24 << 20):
    n128 = g_pad // 128
    best = 128
    for c in range(1, n128 + 1):
        if n128 % c:
            continue
        tile = c * 128
        if tile > max_tile_g:
            break
        if n128 >= 2 and (n128 // c) < 2:
            continue   # keep at least 2 gene tiles for the parallel axis
        if _per_step_bytes(b, t_dim, tile) > vmem_budget:
            break
        best = tile
    return best


# ----------------------------------------------------------------------------
# Batched RHS: t (B,), y (B, 2G) -> (du, ds) each (B, G)
# Larger B amortizes the grn_T stream (it is t-independent); use as many RHS
# rows per call as the solver allows.
# ----------------------------------------------------------------------------
def velocity_encoder_rhs(t, y, prep, *, max_tile_g=1024):
    b, two_g = y.shape
    g = two_g // 2
    t_dim, g_pad = prep["grn_t"].shape

    # RBF emulator, computed once per call in plain XLA (t-dependent but
    # gene-tile-independent) -> single small (B, T) kernel input.
    t_col = jnp.asarray(t, jnp.float32).reshape(b, 1)
    diff = t_col - prep["tau"]
    emu_tf = prep["h"] * jnp.exp(-prep["phi"] * diff * diff) + prep["o"]   # (B, T)

    tile_g = _choose_tile_g(g_pad, b, t_dim, max_tile_g=max_tile_g)
    n_tiles = g_pad // tile_g

    if g == g_pad:
        # u/s tiles are sliced straight out of y by BlockSpec DMA
        # (no wrapper-side slice HLOs): pass y twice with offset index maps.
        u_arr, s_arr = y, y
        u_spec = pl.BlockSpec((b, tile_g), lambda j: (0, j))
        s_spec = pl.BlockSpec((b, tile_g), lambda j: (0, j + n_tiles))
    else:
        # TODO(synk): non-128-multiple gene counts take a wrapper-side
        # split + lane-pad of the state; pad G upstream to avoid it.
        lane_pad = g_pad - g
        u_arr = jnp.pad(y[:, :g], ((0, 0), (0, lane_pad)))
        s_arr = jnp.pad(y[:, g:], ((0, 0), (0, lane_pad)))
        u_spec = pl.BlockSpec((b, tile_g), lambda j: (0, j))
        s_spec = pl.BlockSpec((b, tile_g), lambda j: (0, j))

    in_specs = [
        pl.BlockSpec((b, t_dim), lambda j: (0, 0)),        # emu_tf (full, tiny)
        u_spec,                                            # u tile
        s_spec,                                            # s tile
        pl.BlockSpec((t_dim, tile_g), lambda j: (0, j)),   # grn_T tile
        pl.BlockSpec((4, tile_g), lambda j: (0, j)),       # packed per-gene params
    ]
    out_specs = [
        pl.BlockSpec((b, tile_g), lambda j: (0, j)),
        pl.BlockSpec((b, tile_g), lambda j: (0, j)),
    ]

    # Explicit scoped-VMEM request sized from the actual footprint; the cap
    # keeps it safe on v7x (64 MiB physical) and v5e (16 MiB default scoped).
    vmem_limit = int(min(max(4 * _per_step_bytes(b, t_dim, tile_g), 16 << 20),
                         48 << 20))

    du, ds = pl.pallas_call(
        velocity_encoder_kernel,
        out_shape=(
            jax.ShapeDtypeStruct((b, g_pad), jnp.float32),
            jax.ShapeDtypeStruct((b, g_pad), jnp.float32),
        ),
        grid_spec=pltpu.PrefetchScalarGridSpec(
            num_scalar_prefetch=0,
            grid=(n_tiles,),
            in_specs=in_specs,
            out_specs=out_specs,
        ),
        compiler_params=pltpu.CompilerParams(
            dimension_semantics=("parallel",),
            vmem_limit_bytes=vmem_limit,
        ),
    )(emu_tf, u_arr, s_arr, prep["grn_t"], prep["params"])

    if g_pad != g:
        du = du[:, :g]
        ds = ds[:, :g]
    return du, ds


# ----------------------------------------------------------------------------
# Pure-JAX reference mirroring the PyTorch semantics (batched over rows).
# ----------------------------------------------------------------------------
def _reference_forward(t, y, raw):
    b, two_g = y.shape
    g = two_g // 2
    u = y[:, :g]
    s = y[:, g:]
    h = jnp.exp(raw["log_h"])
    phi = jnp.exp(raw["log_phi"])
    t_col = jnp.asarray(t, jnp.float32).reshape(b, 1)
    emu_tf = h * jnp.exp(-phi * (t_col - raw["tau"]) ** 2) + raw["o"]      # (B, T)
    alpha_unconstr = emu_tf @ raw["grn"].T + raw["alpha_unconstr_bias"]    # (B, G)
    beta = jnp.clip(jnp.logaddexp(raw["beta_mean_unconstr"], 0.0), 0.0, 50.0)
    gamma = jnp.clip(jnp.logaddexp(raw["gamma_mean_unconstr"], 0.0), 0.0, 50.0)
    a = jnp.maximum(alpha_unconstr, 0.001)
    alpha = a / (1.0 + jnp.abs(a)) * jnp.clip(
        jnp.logaddexp(raw["alpha_unconstr_max"], 0.0), 0.0, 50.0
    )
    du = alpha - beta * u
    ds = beta * u - gamma * s
    return jnp.concatenate([du, ds], axis=1)


if __name__ == "__main__":
    n_genes = 256   # targets (multiple of 128 -> lane-aligned tiles, >= 2 tiles)
    n_tf = 16       # regulators
    batch = 8       # RHS evaluations per call (fills the 8-sublane vreg dim)

    key = jax.random.PRNGKey(0)
    keys = jax.random.split(key, 8)

    # Skeleton mask W and GRN init (deterministic, in-script)
    W_mask = (jax.random.uniform(keys[0], (n_genes, n_tf)) > 0.5).astype(jnp.float32)
    W_int = jax.random.normal(keys[1], (n_genes, n_tf), jnp.float32) * 0.1

    raw_params = {
        "grn": W_int * W_mask,                                                # (G, T)
        "log_h": jax.random.normal(keys[2], (1, n_tf), jnp.float32) * 0.1,    # log_h_int
        "log_phi": jnp.ones((1, n_tf), jnp.float32),
        "tau": jnp.ones((1, n_tf), jnp.float32) * 10.0,
        "o": jnp.ones((1, n_tf), jnp.float32),
        "alpha_unconstr_bias": jax.random.normal(keys[3], (1, n_genes), jnp.float32) * 0.1,
        "beta_mean_unconstr": jax.random.normal(keys[4], (1, n_genes), jnp.float32),
        "gamma_mean_unconstr": jax.random.normal(keys[5], (1, n_genes), jnp.float32),
        "alpha_unconstr_max": jax.random.normal(keys[6], (1, n_genes), jnp.float32),
    }

    # One-time precompute (outside any solver loop): hoists exp/softplus,
    # GRN transpose, parameter packing and lane padding.
    prep = prepare_params(raw_params)

    # Inputs: 8 time points, 8 states y = [u | s] of length 2*G each.
    t = jnp.linspace(0.0, 20.0, batch, dtype=jnp.float32)
    y = jax.random.uniform(keys[7], (batch, 2 * n_genes), jnp.float32, 0.0, 2.0)

    rhs = jax.jit(velocity_encoder_rhs)
    du, ds = rhs(t, y, prep)
    du, ds = jax.block_until_ready((du, ds))

    v_ref = _reference_forward(t, y, raw_params)
    assert du.shape == (batch, n_genes) and ds.shape == (batch, n_genes)
    assert jnp.allclose(du, v_ref[:, :n_genes], atol=1e-4, rtol=1e-4), "du mismatch"
    assert jnp.allclose(ds, v_ref[:, n_genes:], atol=1e-4, rtol=1e-4), "ds mismatch"

    print("KERNEL_OK")
</pallas_src>

<mosaic_0001>
module attributes {stable_mosaic.version = 11 : i64} {
  func.func @velocity_encoder_kernel(%arg0: i32, %arg1: memref<8x16xf32, #tpu.memory_space<vmem>>, %arg2: memref<8x128xf32, #tpu.memory_space<vmem>>, %arg3: memref<8x128xf32, #tpu.memory_space<vmem>>, %arg4: memref<16x128xf32, #tpu.memory_space<vmem>>, %arg5: memref<4x128xf32, #tpu.memory_space<vmem>>, %arg6: memref<8x128xf32, #tpu.memory_space<vmem>>, %arg7: memref<8x128xf32, #tpu.memory_space<vmem>>) attributes {dimension_semantics = [#tpu.dimension_semantics<parallel>], iteration_bounds = array<i64: 2>, scalar_prefetch = 0 : i64, scratch_operands = 0 : i64, tpu.core_type = #tpu.core_type<tc>, window_params = [{pipeline_mode = #tpu.pipeline_mode<synchronous>, transform_indices = @transform_0, window_bounds = array<i64: 8, 16>}, {transform_indices = @transform_1, window_bounds = array<i64: 8, 128>}, {transform_indices = @transform_2, window_bounds = array<i64: 8, 128>}, {transform_indices = @transform_3, window_bounds = array<i64: 16, 128>}, {transform_indices = @transform_4, window_bounds = array<i64: 4, 128>}, {transform_indices = @transform_5, window_bounds = array<i64: 8, 128>}, {transform_indices = @transform_6, window_bounds = array<i64: 8, 128>}]} {
    %c0 = arith.constant 0 : index
    %c0_0 = arith.constant 0 : index
    %0 = vector.load %arg1[%c0, %c0_0] : memref<8x16xf32, #tpu.memory_space<vmem>>, vector<8x16xf32>
    %c0_1 = arith.constant 0 : index
    %c0_2 = arith.constant 0 : index
    %1 = vector.load %arg4[%c0_1, %c0_2] : memref<16x128xf32, #tpu.memory_space<vmem>>, vector<16x128xf32>
    %cst = arith.constant dense<0.000000e+00> : vector<8x128xf32>
    %2 = tpu.matmul %0, %1, %cst {dimension_numbers = #tpu.dot_dimension_numbers<[1], [0], [0], [1], [0, 0, 1, 1], [], []>} : vector<8x16xf32>, vector<16x128xf32>, vector<8x128xf32> -> vector<8x128xf32>
    %c0_3 = arith.constant 0 : index
    %c0_4 = arith.constant 0 : index
    %3 = vector.load %arg5[%c0_3, %c0_4] : memref<4x128xf32, #tpu.memory_space<vmem>>, vector<1x128xf32>
    %4 = vector.broadcast %3 : vector<1x128xf32> to vector<8x128xf32>
    %5 = arith.addf %2, %4 : vector<8x128xf32>
    %cst_5 = arith.constant 1.000000e-03 : f32
    %6 = vector.broadcast %cst_5 : f32 to vector<8x128xf32>
    %7 = arith.maximumf %5, %6 : vector<8x128xf32>
    %cst_6 = arith.constant 1.000000e+00 : f32
    %8 = vector.broadcast %cst_6 : f32 to vector<8x128xf32>
    %9 = arith.addf %8, %7 : vector<8x128xf32>
    %10 = arith.divf %7, %9 : vector<8x128xf32>
    %c3 = arith.constant 3 : index
    %c0_7 = arith.constant 0 : index
    %11 = vector.load %arg5[%c3, %c0_7] : memref<4x128xf32, #tpu.memory_space<vmem>>, vector<1x128xf32>
    %12 = vector.broadcast %11 : vector<1x128xf32> to vector<8x128xf32>
    %13 = arith.mulf %10, %12 : vector<8x128xf32>
    %c0_8 = arith.constant 0 : index
    %c0_9 = arith.constant 0 : index
    %14 = vector.load %arg2[%c0_8, %c0_9] : memref<8x128xf32, #tpu.memory_space<vmem>>, vector<8x128xf32>
    %c0_10 = arith.constant 0 : index
    %c0_11 = arith.constant 0 : index
    %15 = vector.load %arg3[%c0_10, %c0_11] : memref<8x128xf32, #tpu.memory_space<vmem>>, vector<8x128xf32>
    %c1 = arith.constant 1 : index
    %c0_12 = arith.constant 0 : index
    %16 = vector.load %arg5[%c1, %c0_12] : memref<4x128xf32, #tpu.memory_space<vmem>>, vector<1x128xf32>
    %17 = vector.broadcast %16 : vector<1x128xf32> to vector<8x128xf32>
    %18 = arith.mulf %17, %14 : vector<8x128xf32>
    %19 = arith.subf %13, %18 : vector<8x128xf32>
    %c0_13 = arith.constant 0 : index
    %c0_14 = arith.constant 0 : index
    %20 = vector.load %arg6[%c0_13, %c0_14] : memref<8x128xf32, #tpu.memory_space<vmem>>, vector<8x128xf32>
    tpu.vector_store %arg6[%c0_13, %c0_14], %19 {strides = array<i32>} : memref<8x128xf32, #tpu.memory_space<vmem>>, vector<8x128xf32>,
    %c2 = arith.constant 2 : index
    %c0_15 = arith.constant 0 : index
    %21 = vector.load %arg5[%c2, %c0_15] : memref<4x128xf32, #tpu.memory_space<vmem>>, vector<1x128xf32>
    %22 = vector.broadcast %21 : vector<1x128xf32> to vector<8x128xf32>
    %23 = arith.mulf %22, %15 : vector<8x128xf32>
    %24 = arith.subf %18, %23 : vector<8x128xf32>
    %c0_16 = arith.constant 0 : index
    %c0_17 = arith.constant 0 : index
    %25 = vector.load %arg7[%c0_16, %c0_17] : memref<8x128xf32, #tpu.memory_space<vmem>>, vector<8x128xf32>
    tpu.vector_store %arg7[%c0_16, %c0_17], %24 {strides = array<i32>} : memref<8x128xf32, #tpu.memory_space<vmem>>, vector<8x128xf32>,
    return
  }
  func.func @transform_0(%arg0: i32) -> (i32, i32) {
    %c0_i32 = arith.constant 0 : i32
    %c0_i32_0 = arith.constant 0 : i32
    %c0_i32_1 = arith.constant 0 : i32
    return %c0_i32, %c0_i32_0 : i32, i32
  }
  func.func @transform_1(%arg0: i32) -> (i32, i32) {
    %c0_i32 = arith.constant 0 : i32
    %c0_i32_0 = arith.constant 0 : i32
    return %c0_i32, %arg0 : i32, i32
  }
  func.func @transform_2(%arg0: i32) -> (i32, i32) {
    %c2_i32 = arith.constant 2 : i32
    %0 = arith.addi %arg0, %c2_i32 : i32
    %c0_i32 = arith.constant 0 : i32
    %c0_i32_0 = arith.constant 0 : i32
    return %c0_i32, %0 : i32, i32
  }
  func.func @transform_3(%arg0: i32) -> (i32, i32) {
    %c0_i32 = arith.constant 0 : i32
    %c0_i32_0 = arith.constant 0 : i32
    return %c0_i32, %arg0 : i32, i32
  }
  func.func @transform_4(%arg0: i32) -> (i32, i32) {
    %c0_i32 = arith.constant 0 : i32
    %c0_i32_0 = arith.constant 0 : i32
    return %c0_i32, %arg0 : i32, i32
  }
  func.func @transform_5(%arg0: i32) -> (i32, i32) {
    %c0_i32 = arith.constant 0 : i32
    %c0_i32_0 = arith.constant 0 : i32
    return %c0_i32, %arg0 : i32, i32
  }
  func.func @transform_6(%arg0: i32) -> (i32, i32) {
    %c0_i32 = arith.constant 0 : i32
    %c0_i32_0 = arith.constant 0 : i32
    return %c0_i32, %arg0 : i32, i32
  }
}

</mosaic_0001>

<llo_original>
// kernel: velocity_encoder_rhs.1
$region0: #{velocity_encoder_rhs.1}
  #allocation0 [shape = 'u32[]', space=smem, size = 0x4, offset = 0x4, fixed_abs, tag = 'smem constant byte address 0x4 - core index']
  #allocation1 [shape = 'u32[144,128]{1,0:T(1,128)}', space=vmem, size = 0x12000, scoped, tag = 'internal scratch']
  %s0 = inlined_call_operand.vmem [shape: f32[8,16], index: 0, kind: input, shape index: {}]
  %s1 = inlined_call_operand.hbm [shape: f32[8,512], index: 1, kind: input, shape index: {}, may-alias: {1,2}]
  %s2 = inlined_call_operand.hbm [shape: f32[8,512], index: 2, kind: input, shape index: {}, may-alias: {1,2}]
  %s3 = inlined_call_operand.vmem [shape: f32[16,256], index: 3, kind: input, shape index: {}]
  %s4 = inlined_call_operand.vmem [shape: f32[4,256], index: 4, kind: input, shape index: {}]
  %s5 = inlined_call_operand.hbm [shape: f32[8,256], index: 5, kind: output, shape index: {0}]
  %s6 = inlined_call_operand.hbm [shape: f32[8,256], index: 6, kind: output, shape index: {1}]
  %7 = xla_tuple %s5, %s6
  %s8 = sld [smem:[#allocation0]]
  $region107: #{velocity_encoder_rhs.1} parent=0
    _
  %s10 = ssub.s32 1, %s8
  %s11 = scalar_select 0, %s10, %s8
  $region1: #{velocity_encoder_rhs.1} parent=0
    #allocation2 [shape = 'u8[8192]{0}', space=vmem, size = 0x2000, scoped, tag = 'input window, operand 1']
    #allocation3 [shape = 's32[2]{0}', space=sflag, size = 0x8, scoped, tag = 'scoped memory for velocity_encoder_rhs.1']
    #allocation4 [shape = 's32[2]{0}', space=sflag, size = 0x8, scoped, tag = 'scoped memory for velocity_encoder_rhs.1']
    #allocation5 [shape = 'u8[8192]{0}', space=vmem, size = 0x2000, scoped, tag = 'input window, operand 2']
    #allocation6 [shape = 's32[2]{0}', space=sflag, size = 0x8, scoped, tag = 'scoped memory for velocity_encoder_rhs.1']
    #allocation7 [shape = 'u8[16384]{0}', space=vmem, size = 0x4000, scoped, tag = 'input window, operand 3']
    #allocation8 [shape = 'u8[8192]{0}', space=vmem, size = 0x2000, scoped, tag = 'output window, operand 0']
    #allocation9 [shape = 'u8[8192]{0}', space=vmem, size = 0x2000, scoped, tag = 'output window, operand 1']
    #allocation10 [shape = 's32[2]{0}', space=sflag, size = 0x8, scoped, tag = 'scoped memory for velocity_encoder_rhs.1']
    %12 = vsyncpa [#allocation3], 0
    %s13 = scalar_lea.sflag [#allocation3], 1
    %14 = vsyncpa %s13, 0
    %15 = vsyncpa [#allocation6], 0
    %s16 = scalar_lea.sflag [#allocation6], 1
    %17 = vsyncpa %s16, 0
    %18 = vsyncpa [#allocation4], 0
    %s19 = scalar_lea.sflag [#allocation4], 1
    %20 = vsyncpa %s19, 0
    %21 = vsyncpa [#allocation10], 0
    %s22 = scalar_lea.sflag [#allocation10], 1
    %23 = vsyncpa %s22, 0
    loop: start=0, step=1, limit=4
    $region2: #{velocity_encoder_rhs.1} parent=1 // loop_pre_header
      _
    $region3: #{velocity_encoder_rhs.1} parent=1 // loop_header
      %s25 = sphi 0, %s29
      %p26 = scmp.ge.s32.totalorder %s25, 4
      %s33 = sphi 0, %s33
      %s35 = sphi 0, %s33
      %s36 = sphi 0, %s35
      %s50 = sphi 0, %s36
      %s56 = sphi 0, %s58
      %s59 = sphi 0, %s56
      %s60 = sphi 0, %s59
      %s76 = sphi 0, %s60
      %s84 = sphi 0, %s86
      %s87 = sphi 0, %s84
      %s88 = sphi 0, %s87
      %s104 = sphi 0, %s88
      %s110 = sphi 0, %s112
      %s113 = sphi 0, %s110
      %s114 = sphi 0, %s113
      %s130 = sphi 0, %s114
      %s136 = sphi 0, %s138
      %s139 = sphi 0, %s136
      %s140 = sphi 0, %s139
      %s156 = sphi 0, %s140
      %s162 = sphi 0, %s164
      %s165 = sphi 0, %s162
      %s166 = sphi 0, %s165
      %s182 = sphi 0, %s166
      %s188 = sphi 0, %s190
      %s191 = sphi 0, %s188
      %s192 = sphi 0, %s191
      %s208 = sphi 0, %s192
    $region4: #{velocity_encoder_rhs.1} parent=1 // loop_header_branch
      %28 = sbr.rel (%p26) target = $region8
    $region5: #{velocity_encoder_rhs.1} parent=1 // loop_body
      %s30 = ssub.s32 %s25, 1
      %s31 = ssub.s32 %s25, 2
      %s32 = sadd.s32 %s25, 1
      %s34 = sadd.s32 %s33, 1
      %p37 = scmp.eq.s32.totalorder %s25, 1
      %p38 = scmp.ne.s32.totalorder %s33, %s35
      %p39 = scmp.eq.s32.totalorder %s25, 0
      %p40 = por %p38, %p39
      %p41 = scmp.ne.s32.totalorder %s33, %s35
      %p42 = scmp.eq.s32.totalorder %s30, 1
      %p43 = por %p41, %p42
      %p44 = scmp.ne.s32.totalorder %s35, %s36
      %p45 = scmp.eq.s32.totalorder %s30, 0
      %p46 = por %p44, %p45
      %p47 = scmp.ne.s32.totalorder %s35, %s36
      %p48 = scmp.eq.s32.totalorder %s31, 1
      %p49 = por %p47, %p48
      %p51 = scmp.ne.s32.totalorder %s36, %s50
      %p52 = scmp.eq.s32.totalorder %s31, 0
      %p53 = por %p51, %p52
      %s54 = ssub.s32 %s25, %s32
      %p55 = scmp.eq.s32.totalorder %s54, 0
      %s57 = sadd.s32 %s56, 1
      %s58 = scalar_select %p55, %s56, %s57
      %p61 = pneg %p55
      %p62 = scmp.eq.s32.totalorder %s25, 1
      %p63 = por %p61, %p62
      %p64 = scmp.ne.s32.totalorder %s56, %s59
      %p65 = scmp.eq.s32.totalorder %s25, 0
      %p66 = por %p64, %p65
      %p67 = scmp.ne.s32.totalorder %s56, %s59
      %p68 = scmp.eq.s32.totalorder %s30, 1
      %p69 = por %p67, %p68
      %p70 = scmp.ne.s32.totalorder %s59, %s60
      %p71 = scmp.eq.s32.totalorder %s30, 0
      %p72 = por %p70, %p71
      %p73 = scmp.ne.s32.totalorder %s59, %s60
      %p74 = scmp.eq.s32.totalorder %s31, 1
      %p75 = por %p73, %p74
      %p77 = scmp.ne.s32.totalorder %s60, %s76
      %p78 = scmp.eq.s32.totalorder %s31, 0
      %p79 = por %p77, %p78
      %s80 = sadd.s32 %s25, 2
      %s81 = sadd.s32 %s32, 2
      %s82 = ssub.s32 %s80, %s81
      %p83 = scmp.eq.s32.totalorder %s82, 0
      %s85 = sadd.s32 %s84, 1
      %s86 = scalar_select %p83, %s84, %s85
      %p89 = pneg %p83
      %p90 = scmp.eq.s32.totalorder %s25, 1
      %p91 = por %p89, %p90
      %p92 = scmp.ne.s32.totalorder %s84, %s87
      %p93 = scmp.eq.s32.totalorder %s25, 0
      %p94 = por %p92, %p93
      %p95 = scmp.ne.s32.totalorder %s84, %s87
      %p96 = scmp.eq.s32.totalorder %s30, 1
      %p97 = por %p95, %p96
      %p98 = scmp.ne.s32.totalorder %s87, %s88
      %p99 = scmp.eq.s32.totalorder %s30, 0
      %p100 = por %p98, %p99
      %p101 = scmp.ne.s32.totalorder %s87, %s88
      %p102 = scmp.eq.s32.totalorder %s31, 1
      %p103 = por %p101, %p102
      %p105 = scmp.ne.s32.totalorder %s88, %s104
      %p106 = scmp.eq.s32.totalorder %s31, 0
      %p107 = por %p105, %p106
      %s108 = ssub.s32 %s25, %s32
      %p109 = scmp.eq.s32.totalorder %s108, 0
      %s111 = sadd.s32 %s110, 1
      %s112 = scalar_select %p109, %s110, %s111
      %p115 = pneg %p109
      %p116 = scmp.eq.s32.totalorder %s25, 1
      %p117 = por %p115, %p116
      %p118 = scmp.ne.s32.totalorder %s110, %s113
      %p119 = scmp.eq.s32.totalorder %s25, 0
      %p120 = por %p118, %p119
      %p121 = scmp.ne.s32.totalorder %s110, %s113
      %p122 = scmp.eq.s32.totalorder %s30, 1
      %p123 = por %p121, %p122
      %p124 = scmp.ne.s32.totalorder %s113, %s114
      %p125 = scmp.eq.s32.totalorder %s30, 0
      %p126 = por %p124, %p125
      %p127 = scmp.ne.s32.totalorder %s113, %s114
      %p128 = scmp.eq.s32.totalorder %s31, 1
      %p129 = por %p127, %p128
      %p131 = scmp.ne.s32.totalorder %s114, %s130
      %p132 = scmp.eq.s32.totalorder %s31, 0
      %p133 = por %p131, %p132
      %s134 = ssub.s32 %s25, %s32
      %p135 = scmp.eq.s32.totalorder %s134, 0
      %s137 = sadd.s32 %s136, 1
      %s138 = scalar_select %p135, %s136, %s137
      %p141 = pneg %p135
      %p142 = scmp.eq.s32.totalorder %s25, 1
      %p143 = por %p141, %p142
      %p144 = scmp.ne.s32.totalorder %s136, %s139
      %p145 = scmp.eq.s32.totalorder %s25, 0
      %p146 = por %p144, %p145
      %p147 = scmp.ne.s32.totalorder %s136, %s139
      %p148 = scmp.eq.s32.totalorder %s30, 1
      %p149 = por %p147, %p148
      %p150 = scmp.ne.s32.totalorder %s139, %s140
      %p151 = scmp.eq.s32.totalorder %s30, 0
      %p152 = por %p150, %p151
      %p153 = scmp.ne.s32.totalorder %s139, %s140
      %p154 = scmp.eq.s32.totalorder %s31, 1
      %p155 = por %p153, %p154
      %p157 = scmp.ne.s32.totalorder %s140, %s156
      %p158 = scmp.eq.s32.totalorder %s31, 0
      %p159 = por %p157, %p158
      %s160 = ssub.s32 %s25, %s32
      %p161 = scmp.eq.s32.totalorder %s160, 0
      %s163 = sadd.s32 %s162, 1
      %s164 = scalar_select %p161, %s162, %s163
      %p167 = pneg %p161
      %p168 = scmp.eq.s32.totalorder %s25, 1
      %p169 = por %p167, %p168
      %p170 = scmp.ne.s32.totalorder %s162, %s165
      %p171 = scmp.eq.s32.totalorder %s25, 0
      %p172 = por %p170, %p171
      %p173 = scmp.ne.s32.totalorder %s162, %s165
      %p174 = scmp.eq.s32.totalorder %s30, 1
      %p175 = por %p173, %p174
      %p176 = scmp.ne.s32.totalorder %s165, %s166
      %p177 = scmp.eq.s32.totalorder %s30, 0
      %p178 = por %p176, %p177
      %p179 = scmp.ne.s32.totalorder %s165, %s166
      %p180 = scmp.eq.s32.totalorder %s31, 1
      %p181 = por %p179, %p180
      %p183 = scmp.ne.s32.totalorder %s166, %s182
      %p184 = scmp.eq.s32.totalorder %s31, 0
      %p185 = por %p183, %p184
      %s186 = ssub.s32 %s25, %s32
      %p187 = scmp.eq.s32.totalorder %s186, 0
      %s189 = sadd.s32 %s188, 1
      %s190 = scalar_select %p187, %s188, %s189
      %p193 = pneg %p187
      %p194 = scmp.eq.s32.totalorder %s25, 1
      %p195 = por %p193, %p194
      %p196 = scmp.ne.s32.totalorder %s188, %s191
      %p197 = scmp.eq.s32.totalorder %s25, 0
      %p198 = por %p196, %p197
      %p199 = scmp.ne.s32.totalorder %s188, %s191
      %p200 = scmp.eq.s32.totalorder %s30, 1
      %p201 = por %p199, %p200
      %p202 = scmp.ne.s32.totalorder %s191, %s192
      %p203 = scmp.eq.s32.totalorder %s30, 0
      %p204 = por %p202, %p203
      %p205 = scmp.ne.s32.totalorder %s191, %s192
      %p206 = scmp.eq.s32.totalorder %s31, 1
      %p207 = por %p205, %p206
      %p209 = scmp.ne.s32.totalorder %s192, %s208
      %p210 = scmp.eq.s32.totalorder %s31, 0
      %p211 = por %p209, %p210
      %p212 = scmp.le.s32.totalorder 1, %s25
      %p213 = scmp.lt.s32.totalorder %s25, 3
      %p214 = pnand %p212, %p213
      %p215 = pneg %p214
      // Predicated region
      $region9: #{velocity_encoder_rhs.1} parent=5 // pred_check
        _
      $region10: #{velocity_encoder_rhs.1} parent=5 // pred_check_branch
        %217 = sbr.rel (%p214) target = $region12
      $region11: #{velocity_encoder_rhs.1} parent=5 // pred_region
        %s218 = ssub.s32 %s25, 1
        // Predicated region
        $region13: #{velocity_encoder_rhs.1} parent=11 // pred_check
          %p219 = pneg %p46
        $region14: #{velocity_encoder_rhs.1} parent=11 // pred_check_branch
          %221 = sbr.rel (%p219) target = $region16
        $region15: #{velocity_encoder_rhs.1} parent=11 // pred_region
          _
        $region16: #{velocity_encoder_rhs.1} parent=11 // pred_fallthru
          _
      $region12: #{velocity_encoder_rhs.1} parent=5 // pred_fallthru
        _
      %p222 = scmp.lt.s32.totalorder %s25, 2
      // Predicated region
      $region17: #{velocity_encoder_rhs.1} parent=5 // pred_check
        %p223 = pneg %p222
      $region18: #{velocity_encoder_rhs.1} parent=5 // pred_check_branch
        %225 = sbr.rel (%p223) target = $region20
      $region19: #{velocity_encoder_rhs.1} parent=5 // pred_region
        // Predicated region
        $region21: #{velocity_encoder_rhs.1} parent=19 // pred_check
          %p226 = pneg %p66
        $region22: #{velocity_encoder_rhs.1} parent=19 // pred_check_branch
          %228 = sbr.rel (%p226) target = $region24
        $region23: #{velocity_encoder_rhs.1} parent=19 // pred_region
          %s229 = sand.u32 %s56, 1
          %s230 = scalar_lea.sflag [#allocation3], %s229
          %s231 = sand.u32 %s56, 1
          %s232 = smul.addr %s231, 8
          %s233 = scalar_lea.vmem [#allocation2], %s232
          %s235 = ssub.s32 128, 128
          %236 = vsyncadd %s230, %s235
          %s237 = smul.addr %s25, 128
          %s238 = scalar_lea.hbm %s1, %s237
          %s240 = sshll.u32 %s233, 4
          %s241 = int_to_ptr.vmem [resolvable:$true] %s240
          %243 = dma.hbm_to_vmem [thread:$0]  %s238, 128, %s241, %s230
        $region24: #{velocity_encoder_rhs.1} parent=19 // pred_fallthru
          _
        // Predicated region
        $region25: #{velocity_encoder_rhs.1} parent=19 // pred_check
          %p244 = pneg %p94
        $region26: #{velocity_encoder_rhs.1} parent=19 // pred_check_branch
          %246 = sbr.rel (%p244) target = $region28
        $region27: #{velocity_encoder_rhs.1} parent=19 // pred_region
          %s247 = sand.u32 %s84, 1
          %s248 = scalar_lea.sflag [#allocation6], %s247
          %s249 = sand.u32 %s84, 1
          %s250 = smul.addr %s249, 8
          %s251 = scalar_lea.vmem [#allocation5], %s250
          %s252 = sadd.s32 %s25, 2
          %s254 = ssub.s32 128, 128
          %255 = vsyncadd %s248, %s254
          %s256 = smul.addr %s252, 128
          %s257 = scalar_lea.hbm %s2, %s256
          %s259 = sshll.u32 %s251, 4
          %s260 = int_to_ptr.vmem [resolvable:$true] %s259
          %262 = dma.hbm_to_vmem [thread:$0]  %s257, 128, %s260, %s248
        $region28: #{velocity_encoder_rhs.1} parent=19 // pred_fallthru
          _
        // Predicated region
        $region29: #{velocity_encoder_rhs.1} parent=19 // pred_check
          %p263 = pneg %p120
        $region30: #{velocity_encoder_rhs.1} parent=19 // pred_check_branch
          %265 = sbr.rel (%p263) target = $region32
        $region31: #{velocity_encoder_rhs.1} parent=19 // pred_region
          %s266 = sand.u32 %s110, 1
          %s267 = sand.u32 %s110, 1
          %s268 = smul.addr %s267, 16
          %s269 = scalar_lea.vmem [#allocation7], %s268
          %s270 = smul.addr %s25, 8
          %s271 = scalar_lea.vmem %s3, %s270
          // Predicated region
          $region33: #{velocity_encoder_rhs.1} parent=31 // pred_check
            _
          $region34: #{velocity_encoder_rhs.1} parent=31 // pred_check_branch
            %273 = sbr.rel (0) target = $region36
          $region35: #{velocity_encoder_rhs.1} parent=31 // pred_region
            // Predicated region
            $region37: #{velocity_encoder_rhs.1} parent=35 // pred_check
              _
            $region38: #{velocity_encoder_rhs.1} parent=35 // pred_check_branch
              %275 = sbr.rel (0) target = $region40
            $region39: #{velocity_encoder_rhs.1} parent=35 // pred_region
              // Predicated region
              $region52: #{velocity_encoder_rhs.1} parent=39 // pred_check
                _
              $region53: #{velocity_encoder_rhs.1} parent=39 // pred_check_branch
                %292 = sbr.rel (0) target = $region55
              $region54: #{velocity_encoder_rhs.1} parent=39 // pred_region
                loop: start=0, step=1, limit=1
                $region56: #{velocity_encoder_rhs.1} parent=54 // loop_pre_header
                  _
                $region57: #{velocity_encoder_rhs.1} parent=54 // loop_header
                  %s294 = sphi 0, %s298
                  %p295 = scmp.ge.s32.totalorder %s294, 1
                  %s299 = sphi %s271, %s271
                  %s300 = sphi %s269, %s269
                $region58: #{velocity_encoder_rhs.1} parent=54 // loop_header_branch
                  %297 = sbr.rel (%p295) target = $region62
                $region59: #{velocity_encoder_rhs.1} parent=54 // loop_body
                  %v301 = vld [vmem:[%s299] sm:$0xff]
                  %302 = vst [vmem:[%s300] sm:$0xff] %v301
                  %v303 = vld [vmem:[%s299 + $0x10] sm:$0xff]
                  %304 = vst [vmem:[%s300 + $0x8] sm:$0xff] %v303
                $region60: #{velocity_encoder_rhs.1} parent=54 // loop_footer
                  %s298 = sadd.s32 1, %s294
                $region61: #{velocity_encoder_rhs.1} parent=54 // loop_footer_branch
                  %293 = sbr.rel target = $region57
                $region62: #{velocity_encoder_rhs.1} parent=54 // loop_exit
                  _
              $region55: #{velocity_encoder_rhs.1} parent=39 // pred_fallthru
                _
              // Predicated region
              $region63: #{velocity_encoder_rhs.1} parent=39 // pred_check
                _
              $region64: #{velocity_encoder_rhs.1} parent=39 // pred_check_branch
                %306 = sbr.rel target = $region66
              $region65: #{velocity_encoder_rhs.1} parent=39 // pred_region
                _
              $region66: #{velocity_encoder_rhs.1} parent=39 // pred_fallthru
                _
            $region40: #{velocity_encoder_rhs.1} parent=35 // pred_fallthru
              _
            // Predicated region
            $region41: #{velocity_encoder_rhs.1} parent=35 // pred_check
              _
            $region42: #{velocity_encoder_rhs.1} parent=35 // pred_check_branch
              %277 = sbr.rel target = $region44
            $region43: #{velocity_encoder_rhs.1} parent=35 // pred_region
              loop: start=0, step=1, limit=1
              $region45: #{velocity_encoder_rhs.1} parent=43 // loop_pre_header
                _
              $region46: #{velocity_encoder_rhs.1} parent=43 // loop_header
                %s280 = sphi 0, %s284
                %p281 = scmp.ge.s32.totalorder %s280, 1
                %s285 = sphi %s271, %s271
                %s286 = sphi %s269, %s269
              $region47: #{velocity_encoder_rhs.1} parent=43 // loop_header_branch
                %283 = sbr.rel (%p281) target = $region51
              $region48: #{velocity_encoder_rhs.1} parent=43 // loop_body
                %v287 = vld [vmem:[%s285] sm:$0xff]
                %288 = vst [vmem:[%s286] sm:$0xff] %v287
                %v289 = vld [vmem:[%s285 + $0x10] sm:$0xff]
                %290 = vst [vmem:[%s286 + $0x8] sm:$0xff] %v289
              $region49: #{velocity_encoder_rhs.1} parent=43 // loop_footer
                %s284 = sadd.s32 1, %s280
              $region50: #{velocity_encoder_rhs.1} parent=43 // loop_footer_branch
                %279 = sbr.rel target = $region46
              $region51: #{velocity_encoder_rhs.1} parent=43 // loop_exit
                _
            $region44: #{velocity_encoder_rhs.1} parent=35 // pred_fallthru
              _
          $region36: #{velocity_encoder_rhs.1} parent=31 // pred_fallthru
            _
          %307 = vnop
        $region32: #{velocity_encoder_rhs.1} parent=19 // pred_fallthru
          _
        // Predicated region
        $region67: #{velocity_encoder_rhs.1} parent=19 // pred_check
          %p308 = pneg %p146
        $region68: #{velocity_encoder_rhs.1} parent=19 // pred_check_branch
          %310 = sbr.rel (%p308) target = $region70
        $region69: #{velocity_encoder_rhs.1} parent=19 // pred_region
          %p311 = scmp.lt.s32.totalorder %s25, 1
          %s312 = scalar_select %p311, %s25, 1
          %s313 = smul.addr %s312, 4
          %s314 = scalar_lea.vmem %s4, %s313
        $region70: #{velocity_encoder_rhs.1} parent=19 // pred_fallthru
          _
      $region20: #{velocity_encoder_rhs.1} parent=5 // pred_fallthru
        _
      %p315 = scmp.le.s32.totalorder 1, %s25
      %p316 = scmp.lt.s32.totalorder %s25, 3
      %p317 = pnand %p315, %p316
      %p318 = pneg %p317
      // Predicated region
      $region71: #{velocity_encoder_rhs.1} parent=5 // pred_check
        _
      $region72: #{velocity_encoder_rhs.1} parent=5 // pred_check_branch
        %320 = sbr.rel (%p317) target = $region74
      $region73: #{velocity_encoder_rhs.1} parent=5 // pred_region
        %s321 = ssub.s32 %s25, 1
        %s322 = sand.u32 %s59, 1
        %s323 = scalar_lea.sflag [#allocation3], %s322
        %s324 = sand.u32 %s59, 1
        %s325 = smul.addr %s324, 8
        %s326 = scalar_lea.vmem [#allocation2], %s325
        // Predicated region
        $region75: #{velocity_encoder_rhs.1} parent=73 // pred_check
          %p327 = pneg %p72
        $region76: #{velocity_encoder_rhs.1} parent=73 // pred_check_branch
          %329 = sbr.rel (%p327) target = $region78
        $region77: #{velocity_encoder_rhs.1} parent=73 // pred_region
          %330 = dma.done %s323, 128
        $region78: #{velocity_encoder_rhs.1} parent=73 // pred_fallthru
          _
        %s331 = sand.u32 %s87, 1
        %s332 = scalar_lea.sflag [#allocation6], %s331
        %s333 = sand.u32 %s87, 1
        %s334 = smul.addr %s333, 8
        %s335 = scalar_lea.vmem [#allocation5], %s334
        // Predicated region
        $region79: #{velocity_encoder_rhs.1} parent=73 // pred_check
          %p336 = pneg %p100
        $region80: #{velocity_encoder_rhs.1} parent=73 // pred_check_branch
          %338 = sbr.rel (%p336) target = $region82
        $region81: #{velocity_encoder_rhs.1} parent=73 // pred_region
          %339 = dma.done %s332, 128
        $region82: #{velocity_encoder_rhs.1} parent=73 // pred_fallthru
          _
        %s340 = sand.u32 %s113, 1
        %s341 = sand.u32 %s113, 1
        %s342 = smul.addr %s341, 16
        %s343 = scalar_lea.vmem [#allocation7], %s342
        // Predicated region
        $region83: #{velocity_encoder_rhs.1} parent=73 // pred_check
          %p344 = pneg %p126
        $region84: #{velocity_encoder_rhs.1} parent=73 // pred_check_branch
          %346 = sbr.rel (%p344) target = $region86
        $region85: #{velocity_encoder_rhs.1} parent=73 // pred_region
          _
        $region86: #{velocity_encoder_rhs.1} parent=73 // pred_fallthru
          _
        %p347 = pneg %p46
        %p348 = pneg %p43
        %s349 = sand.u32 %s59, 1
        %s350 = scalar_lea.sflag [#allocation3], %s349
        %s351 = sand.u32 %s59, 1
        %s352 = smul.addr %s351, 8
        %s353 = scalar_lea.vmem [#allocation2], %s352
        %p354 = pneg %p72
        %p355 = pneg %p69
        %s356 = sand.u32 %s87, 1
        %s357 = scalar_lea.sflag [#allocation6], %s356
        %s358 = sand.u32 %s87, 1
        %s359 = smul.addr %s358, 8
        %s360 = scalar_lea.vmem [#allocation5], %s359
        %p361 = pneg %p100
        %p362 = pneg %p97
        %s363 = sand.u32 %s113, 1
        %s364 = sand.u32 %s113, 1
        %s365 = smul.addr %s364, 16
        %s366 = scalar_lea.vmem [#allocation7], %s365
        %p367 = pneg %p126
        %p368 = pneg %p123
        %p369 = scmp.lt.s32.totalorder %s30, 1
        %s370 = scalar_select %p369, %s30, 1
        %s371 = smul.addr %s370, 4
        %s372 = scalar_lea.vmem %s4, %s371
        %p373 = pneg %p152
        %p374 = pneg %p149
        %p375 = pneg %p178
        %p376 = pneg %p175
        %s377 = sand.u32 %s165, 1
        %s378 = scalar_lea.sflag [#allocation4], %s377
        %s379 = sand.u32 %s165, 1
        %s380 = smul.addr %s379, 8
        %s381 = scalar_lea.vmem [#allocation8], %s380
        %p382 = pneg %p204
        %p383 = pneg %p201
        %s384 = sand.u32 %s191, 1
        %s385 = scalar_lea.sflag [#allocation10], %s384
        %s386 = sand.u32 %s191, 1
        %s387 = smul.addr %s386, 8
        %s388 = scalar_lea.vmem [#allocation9], %s387
        %s389 = sadd.s32 %s30, 2
        %p390 = scmp.lt.s32.totalorder %s30, 1
        %s391 = scalar_select %p390, %s30, 1
        %s392 = smul.addr %s391, 4
        %s393 = scalar_lea.vmem %s4, %s392
        %v394 = vld [vmem:[%s0] sm:$0xff]
        %v395 = vld [vmem:[%s343] sm:$0xff]
        %v396 = vld [vmem:[%s343 + $0x8] sm:$0xff]
        %v397 = vld [vmem:[%s393] sm:$0x1]
        %v398 = vlaneseq
        %v399 = vshrl.u32 %v398, 7
        %v400 = vsub.s32 0, %v399
        %v401 = vrot.slane %v397, %v400
        %vm402 = vcmask 130048
        %v404 = vsel %vm402, %v394, 0
        %406 = vmatprep.subr.mxu0 0.0
        %407 = vmatpush1.msra.mxu0 %v395
        %408 = vmatprep.subr.mxu0 0.0
        %409 = vmatpush1.msra.mxu0 %v396
        %410 = vmatprep.subr.mxu0 0.0
        %411 = vmatpush1.msra.mxu0 0.0
        %412 = vmatprep.subr.mxu0 0.0
        %413 = vmatpush1.msra.mxu0 0.0
        %414 = vmatprep.subr.mxu0 0.0
        %415 = vmatpush1.msra.mxu0 0.0
        %416 = vmatprep.subr.mxu0 0.0
        %417 = vmatpush1.msra.mxu0 0.0
        %418 = vmatprep.subr.mxu0 0.0
        %419 = vmatpush1.msra.mxu0 0.0
        %420 = vmatprep.subr.mxu0 0.0
        %421 = vmatpush1.msra.mxu0 0.0
        %422 = vmatprep.subr.mxu0 0.0
        %423 = vmatpush1.msra.mxu0 0.0
        %424 = vmatprep.subr.mxu0 0.0
        %425 = vmatpush1.msra.mxu0 0.0
        %426 = vmatprep.subr.mxu0 0.0
        %427 = vmatpush1.msra.mxu0 0.0
        %428 = vmatprep.subr.mxu0 0.0
        %429 = vmatpush1.msra.mxu0 0.0
        %430 = vmatprep.subr.mxu0 0.0
        %431 = vmatpush1.msra.mxu0 0.0
        %432 = vmatprep.subr.mxu0 0.0
        %433 = vmatpush1.msra.mxu0 0.0
        %434 = vmatprep.subr.mxu0 0.0
        %435 = vmatpush1.msra.mxu0 0.0
        %436 = vmatprep.subr.mxu0 0.0
        %437 = vmatpush1.msra.mxu0 0.0
        %438 = vmatprep.subr.mxu0 0.0
        %439 = vmatpush1.msra.mxu0 0.0
        %440 = vmatprep.subr.mxu0 0.0
        %441 = vmatpush1.msra.mxu0 0.0
        %442 = vmatprep.subr.mxu0 0.0
        %443 = vmatpush1.msra.mxu0 0.0
        %444 = vmatprep.subr.mxu0 0.0
        %445 = vmatpush1.msra.mxu0 0.0
        %446 = vmatprep.subr.mxu0 0.0
        %447 = vmatpush1.msra.mxu0 0.0
        %448 = vmatprep.subr.mxu0 0.0
        %449 = vmatpush1.msra.mxu0 0.0
        %450 = vmatprep.subr.mxu0 0.0
        %451 = vmatpush1.msra.mxu0 0.0
        %452 = vmatprep.subr.mxu0 0.0
        %453 = vmatpush1.msra.mxu0 0.0
        %454 = vmatprep.subr.mxu0 0.0
        %455 = vmatpush1.msra.mxu0 0.0
        %456 = vmatprep.subr.mxu0 0.0
        %457 = vmatpush1.msra.mxu0 0.0
        %458 = vmatprep.subr.mxu0 0.0
        %459 = vmatpush1.msra.mxu0 0.0
        %460 = vmatprep.subr.mxu0 0.0
        %461 = vmatpush1.msra.mxu0 0.0
        %462 = vmatprep.subr.mxu0 0.0
        %463 = vmatpush1.msra.mxu0 0.0
        %464 = vmatprep.subr.mxu0 0.0
        %465 = vmatpush1.msra.mxu0 0.0
        %466 = vmatprep.subr.mxu0 0.0
        %467 = vmatpush1.msra.mxu0 0.0
        %468 = vmatprep.subr.mxu0 0.0
        %469 = vmatpush1.msra.mxu0 0.0
        %470 = vmatprep.mubr.f32.mxu0 0.0
        %471 = vmatmul.mubr.f32.gmra.mrb[0].mxu0 %v404
        %v472 = vpop.f32.mrb[0].mxu0
        %v473 = vadd.f32 %v401, %v472
        %v474 = vpop.f32.mrb[0].mxu0
        %475 = vdwg.mxu0
        %v476 = vmax.f32 %v473, 0.001
        %v477 = vadd.f32 %v476, 1.0
        %v478 = vrcp.pop %v477
        %v479 = vmul.f32 %v476, %v478
        %v480 = vld [vmem:[%s393 + $0x3] sm:$0x1]
        %v481 = vlaneseq
        %v482 = vshrl.u32 %v481, 7
        %v483 = vsub.s32 0, %v482
        %v484 = vrot.slane %v480, %v483
        %v485 = vmul.f32 %v479, %v484
        %v486 = vld [vmem:[%s326] sm:$0xff]
        %v487 = vld [vmem:[%s335] sm:$0xff]
        %v488 = vld [vmem:[%s393 + $0x1] sm:$0x1]
        %v489 = vlaneseq
        %v490 = vshrl.u32 %v489, 7
        %v491 = vsub.s32 0, %v490
        %v492 = vrot.slane %v488, %v491
        %v493 = vmul.f32 %v492, %v486
        %v494 = vsub.f32 %v485, %v493
        %495 = vst [vmem:[%s381] sm:$0xff] %v494
        %v496 = vld [vmem:[%s393 + $0x2] sm:$0x1]
        %v497 = vlaneseq
        %v498 = vshrl.u32 %v497, 7
        %v499 = vsub.s32 0, %v498
        %v500 = vrot.slane %v496, %v499
        %v501 = vmul.f32 %v500, %v487
        %v502 = vsub.f32 %v493, %v501
        %503 = vst [vmem:[%s388] sm:$0xff] %v502
        %s504 = sand.u32 %s165, 1
        %s505 = scalar_lea.sflag [#allocation4], %s504
        %s506 = sand.u32 %s165, 1
        %s507 = smul.addr %s506, 8
        %s508 = scalar_lea.vmem [#allocation8], %s507
        %s509 = sand.u32 %s191, 1
        %s510 = scalar_lea.sflag [#allocation10], %s509
        %s511 = sand.u32 %s191, 1
        %s512 = smul.addr %s511, 8
        %s513 = scalar_lea.vmem [#allocation9], %s512
        // Predicated region
        $region87: #{velocity_encoder_rhs.1} parent=73 // pred_check
          %p514 = pneg %p175
        $region88: #{velocity_encoder_rhs.1} parent=73 // pred_check_branch
          %516 = sbr.rel (%p514) target = $region90
        $region89: #{velocity_encoder_rhs.1} parent=73 // pred_region
          %s518 = ssub.s32 128, 128
          %519 = vsyncadd %s505, %s518
          %s520 = smul.addr %s30, 128
          %s521 = scalar_lea.hbm %s5, %s520
          %s523 = sshll.u32 %s508, 4
          %s524 = int_to_ptr.vmem [resolvable:$true] %s523
          %526 = dma.vmem_to_hbm [thread:$0]  %s524, 128, %s521, %s505
        $region90: #{velocity_encoder_rhs.1} parent=73 // pred_fallthru
          _
        // Predicated region
        $region91: #{velocity_encoder_rhs.1} parent=73 // pred_check
          %p527 = pneg %p201
        $region92: #{velocity_encoder_rhs.1} parent=73 // pred_check_branch
          %529 = sbr.rel (%p527) target = $region94
        $region93: #{velocity_encoder_rhs.1} parent=73 // pred_region
          %s531 = ssub.s32 128, 128
          %532 = vsyncadd %s510, %s531
          %s533 = smul.addr %s30, 128
          %s534 = scalar_lea.hbm %s6, %s533
          %s536 = sshll.u32 %s513, 4
          %s537 = int_to_ptr.vmem [resolvable:$true] %s536
          %539 = dma.vmem_to_hbm [thread:$0]  %s537, 128, %s534, %s510
        $region94: #{velocity_encoder_rhs.1} parent=73 // pred_fallthru
          _
      $region74: #{velocity_encoder_rhs.1} parent=5 // pred_fallthru
        _
      %p540 = scmp.le.s32.totalorder 2, %s25
      // Predicated region
      $region95: #{velocity_encoder_rhs.1} parent=5 // pred_check
        %p541 = pneg %p540
      $region96: #{velocity_encoder_rhs.1} parent=5 // pred_check_branch
        %543 = sbr.rel (%p541) target = $region98
      $region97: #{velocity_encoder_rhs.1} parent=5 // pred_region
        %s544 = ssub.s32 %s25, 2
        // Predicated region
        $region99: #{velocity_encoder_rhs.1} parent=97 // pred_check
          %p545 = pneg %p181
        $region100: #{velocity_encoder_rhs.1} parent=97 // pred_check_branch
          %547 = sbr.rel (%p545) target = $region102
        $region101: #{velocity_encoder_rhs.1} parent=97 // pred_region
          %s548 = sand.u32 %s166, 1
          %s549 = scalar_lea.sflag [#allocation4], %s548
          %s550 = sand.u32 %s166, 1
          %s551 = smul.addr %s550, 8
          %s552 = scalar_lea.vmem [#allocation8], %s551
          %553 = dma.done %s549, 128
        $region102: #{velocity_encoder_rhs.1} parent=97 // pred_fallthru
          _
        // Predicated region
        $region103: #{velocity_encoder_rhs.1} parent=97 // pred_check
          %p554 = pneg %p207
        $region104: #{velocity_encoder_rhs.1} parent=97 // pred_check_branch
          %556 = sbr.rel (%p554) target = $region106
        $region105: #{velocity_encoder_rhs.1} parent=97 // pred_region
          %s557 = sand.u32 %s192, 1
          %s558 = scalar_lea.sflag [#allocation10], %s557
          %s559 = sand.u32 %s192, 1
          %s560 = smul.addr %s559, 8
          %s561 = scalar_lea.vmem [#allocation9], %s560
          %562 = dma.done %s558, 128
        $region106: #{velocity_encoder_rhs.1} parent=97 // pred_fallthru
          _
      $region98: #{velocity_encoder_rhs.1} parent=5 // pred_fallthru
        _
    $region6: #{velocity_encoder_rhs.1} parent=1 // loop_footer
      %s29 = sadd.s32 1, %s25
    $region7: #{velocity_encoder_rhs.1} parent=1 // loop_footer_branch
      %24 = sbr.rel target = $region3
    $region8: #{velocity_encoder_rhs.1} parent=1 // loop_exit
      _
    %563 = vsyncpa [#allocation3], 1
    %s564 = scalar_lea.sflag [#allocation3], 1
    %565 = vsyncpa %s564, 1
    %566 = vsyncpa [#allocation6], 1
    %s567 = scalar_lea.sflag [#allocation6], 1
    %568 = vsyncpa %s567, 1
    %569 = vsyncpa [#allocation4], 1
    %s570 = scalar_lea.sflag [#allocation4], 1
    %571 = vsyncpa %s570, 1
    %572 = vsyncpa [#allocation10], 1
    %s573 = scalar_lea.sflag [#allocation10], 1
    %574 = vsyncpa %s573, 1

</llo_original>
